<compile_context>
chip_gen: v5e
topology: v5e:2x2
jax: 0.10.0
libtpu: 0.0.40
codegen_flags: <defaults>
</compile_context>

<pallas_src>
import jax
import jax.numpy as jnp
from jax.experimental import pallas as pl
from jax.experimental.pallas import tpu as pltpu

EPS = 1e-6


def _make_trid_kernel(hw_true: int, hw_pad: int):
    """Build the row-normalize + statistic-mix kernel for a given spatial size."""
    need_mask = hw_pad != hw_true
    inv_hw = 1.0 / float(hw_true)
    inv_denom = 1.0 / float(max(hw_true - 1, 1))  # unbiased var; guard HW == 1

    def kernel(x_ref, side_ref, o_ref):
        # x_ref:    (TR, HW_pad)  block of rows, spatial pixels on lanes
        # side_ref: (TR, 3)       columns: [bernoulli, mu_random*b, var_random*b]
        x = x_ref[...].astype(jnp.float32)

        if need_mask:
            lane = jax.lax.broadcasted_iota(jnp.int32, x.shape, 1)
            valid = (lane < hw_true).astype(jnp.float32)
            xv = x * valid
        else:
            xv = x

        mu = jnp.sum(xv, axis=-1, keepdims=True) * inv_hw          # (TR, 1)
        diff = x - mu
        dv = diff * valid if need_mask else diff
        var = jnp.sum(dv * dv, axis=-1, keepdims=True) * inv_denom  # (TR, 1)
        inv_sig = jax.lax.rsqrt(var + jnp.float32(EPS))             # EUP slot

        side = side_ref[...].astype(jnp.float32)                    # (TR, 3)
        b = side[:, 0:1]
        mu_rb = side[:, 1:2]        # mu_random  * bernoulli
        var_rb = side[:, 2:3]       # var_random * bernoulli
        one_m_b = 1.0 - b

        # out = ((x-mu)/sig)*(var_r*b + sig*(1-b)) + (mu_r*b + mu*(1-b))
        #     = diff*(var_r*b*inv_sig + (1-b)) + (mu_r*b + mu*(1-b))
        scale = var_rb * inv_sig + one_m_b                          # (TR, 1)
        shift = mu_rb + mu * one_m_b                                # (TR, 1)
        o_ref[...] = (diff * scale + shift).astype(o_ref.dtype)

    return kernel


def _choose_tile_rows(n_rows: int, hw_pad: int) -> int:
    """Row-tile: ~2 MiB f32 x-blocks, multiple of 8 sublanes, capped at 1024.

    Keeps double-buffered in+out blocks plus f32 temporaries well under the
    32 MiB scoped-VMEM limit on every generation (v5e/v6e/v7x)."""
    target_bytes = 2 * 1024 * 1024
    tr = target_bytes // (hw_pad * 4)
    tr = int(max(8, min(tr, 1024)))
    tr = (tr // 8) * 8
    if tr >= n_rows:
        tr = ((n_rows + 7) // 8) * 8  # single block, rounded up to sublanes
    return tr


def trid_stylize(x, mu_random, var_random, bernoulli):
    """The stylized branch of TriD.forward as a Pallas TPU kernel.

    x: (N, C, H, W); mu_random/var_random/bernoulli: (N*C, 1) float32.
    """
    N, C, H, W = x.shape
    R, HW = N * C, H * W
    hw_pad = max(128, ((HW + 127) // 128) * 128)   # lane-dense blocks
    tr = _choose_tile_rows(R, hw_pad)
    r_pad = ((R + tr - 1) // tr) * tr

    x2 = x.reshape(R, HW)
    if (r_pad, hw_pad) != (R, HW):
        x2 = jnp.pad(x2, ((0, r_pad - R), (0, hw_pad - HW)))

    b = bernoulli.reshape(R, 1).astype(jnp.float32)
    side = jnp.concatenate(
        [b,
         mu_random.reshape(R, 1).astype(jnp.float32) * b,
         var_random.reshape(R, 1).astype(jnp.float32) * b],
        axis=1)                                                   # (R, 3)
    if r_pad != R:
        side = jnp.pad(side, ((0, r_pad - R), (0, 0)))

    kernel = _make_trid_kernel(HW, hw_pad)
    out2 = pl.pallas_call(
        kernel,
        out_shape=jax.ShapeDtypeStruct((r_pad, hw_pad), x.dtype),
        grid_spec=pl.GridSpec(
            grid=(r_pad // tr,),
            in_specs=[
                pl.BlockSpec((tr, hw_pad), lambda i: (i, 0)),
                pl.BlockSpec((tr, 3), lambda i: (i, 0)),
            ],
            out_specs=pl.BlockSpec((tr, hw_pad), lambda i: (i, 0)),
        ),
        compiler_params=pltpu.CompilerParams(
            dimension_semantics=("parallel",),       # megacore sharding on v7x
            vmem_limit_bytes=32 * 1024 * 1024,
        ),
    )(x2, side)

    if (r_pad, hw_pad) != (R, HW):
        out2 = out2[:R, :HW]
    return out2.reshape(N, C, H, W)


def trid_forward(x, key, p=0.5, alpha=0.1):
    """Reproduces TriD.forward (activated=True) semantics."""
    N, C, _, _ = x.shape
    R = N * C
    k_gate, k_rand = jax.random.split(key)
    # `random.random() > self.p: return x`  -> apply iff u <= p
    apply_gate = jax.random.uniform(k_gate, ()) <= p

    def _apply(ops):
        x_, k_ = ops
        k_mu, k_var, k_beta, k_bern = jax.random.split(k_, 4)
        mu_r = jax.random.uniform(k_mu, (R, 1), dtype=jnp.float32)
        var_r = jax.random.uniform(k_var, (R, 1), dtype=jnp.float32)
        lmda = jax.random.beta(k_beta, alpha, alpha, (R, 1)).astype(jnp.float32)
        bern = jax.random.bernoulli(k_bern, lmda).astype(jnp.float32)
        return trid_stylize(x_, mu_r, var_r, bern)

    def _identity(ops):
        return ops[0]

    # Gate around the kernel: identity branch skips both HBM passes entirely.
    return jax.lax.cond(apply_gate, _apply, _identity, (x, k_rand))


def _reference(x, mu_random, var_random, bernoulli, eps=EPS):
    """Pure-JAX reference of the stylized branch (matches torch semantics)."""
    N, C, H, W = x.shape
    mu = x.mean(axis=(2, 3), keepdims=True)
    var = x.var(axis=(2, 3), keepdims=True, ddof=1)
    sig = jnp.sqrt(var + eps)
    x_normed = (x - mu) / sig
    mu_r = mu_random.reshape(N, C, 1, 1)
    var_r = var_random.reshape(N, C, 1, 1)
    b = bernoulli.reshape(N, C, 1, 1)
    mu_mix = mu_r * b + mu * (1.0 - b)
    sig_mix = var_r * b + sig * (1.0 - b)
    return x_normed * sig_mix + mu_mix


if __name__ == "__main__":
    key = jax.random.PRNGKey(0)
    k_x, k_trid, k_mu, k_var, k_bern, k_x2 = jax.random.split(key, 6)

    # Lane-dense case: H*W = 256 (multiple of 128).
    N, C, H, W = 2, 4, 16, 16
    x = jax.random.normal(k_x, (N, C, H, W), dtype=jnp.float32)
    mu_r = jax.random.uniform(k_mu, (N * C, 1), dtype=jnp.float32)
    var_r = jax.random.uniform(k_var, (N * C, 1), dtype=jnp.float32)
    bern = jax.random.bernoulli(k_bern, 0.5, (N * C, 1)).astype(jnp.float32)

    out = jax.block_until_ready(trid_stylize(x, mu_r, var_r, bern))
    ref = _reference(x, mu_r, var_r, bern)
    assert out.shape == x.shape and out.dtype == x.dtype
    assert bool(jnp.all(jnp.isfinite(out)))
    assert bool(jnp.allclose(out, ref, atol=2e-3, rtol=2e-3))

    # Masked-lane case: H*W = 49, padded to 128 with masked reductions.
    x_small = jax.random.normal(k_x2, (N, C, 7, 7), dtype=jnp.float32)
    out_small = jax.block_until_ready(trid_stylize(x_small, mu_r, var_r, bern))
    ref_small = _reference(x_small, mu_r, var_r, bern)
    assert bool(jnp.allclose(out_small, ref_small, atol=2e-3, rtol=2e-3))

    # Full forward with the probability-p gate (lax.cond around the kernel).
    out_fwd = jax.block_until_ready(trid_forward(x, k_trid, p=0.5, alpha=0.1))
    assert out_fwd.shape == x.shape and out_fwd.dtype == x.dtype
    assert bool(jnp.all(jnp.isfinite(out_fwd)))

    print("KERNEL_OK")
</pallas_src>

<mosaic_0001>
module attributes {stable_mosaic.version = 11 : i64} {
  func.func @kernel(%arg0: i32, %arg1: memref<8x256xf32, #tpu.memory_space<vmem>>, %arg2: memref<8x3xf32, #tpu.memory_space<vmem>>, %arg3: memref<8x256xf32, #tpu.memory_space<vmem>>) attributes {dimension_semantics = [#tpu.dimension_semantics<parallel>], iteration_bounds = array<i64: 1>, scalar_prefetch = 0 : i64, scratch_operands = 0 : i64, tpu.core_type = #tpu.core_type<tc>, window_params = [{transform_indices = @transform_0, window_bounds = array<i64: 8, 256>}, {transform_indices = @transform_1, window_bounds = array<i64: 8, 3>}, {transform_indices = @transform_2, window_bounds = array<i64: 8, 256>}]} {
    %c0 = arith.constant 0 : index
    %c0_0 = arith.constant 0 : index
    %0 = vector.load %arg1[%c0, %c0_0] : memref<8x256xf32, #tpu.memory_space<vmem>>, vector<8x256xf32>
    %cst = arith.constant dense<0.000000e+00> : vector<8xf32>
    %1 = vector.multi_reduction <add>, %0, %cst [1] : vector<8x256xf32> to vector<8xf32>
    %2 = vector.shape_cast %1 : vector<8xf32> to vector<8x1xf32>
    %cst_1 = arith.constant 3.906250e-03 : f32
    %3 = vector.broadcast %cst_1 : f32 to vector<8x1xf32>
    %4 = arith.mulf %2, %3 : vector<8x1xf32>
    %5 = vector.broadcast %4 : vector<8x1xf32> to vector<8x256xf32>
    %6 = arith.subf %0, %5 : vector<8x256xf32>
    %7 = arith.mulf %6, %6 : vector<8x256xf32>
    %cst_2 = arith.constant dense<0.000000e+00> : vector<8xf32>
    %8 = vector.multi_reduction <add>, %7, %cst_2 [1] : vector<8x256xf32> to vector<8xf32>
    %9 = vector.shape_cast %8 : vector<8xf32> to vector<8x1xf32>
    %cst_3 = arith.constant 0.00392156886 : f32
    %10 = vector.broadcast %cst_3 : f32 to vector<8x1xf32>
    %11 = arith.mulf %9, %10 : vector<8x1xf32>
    %cst_4 = arith.constant 9.99999997E-7 : f32
    %12 = vector.broadcast %cst_4 : f32 to vector<8x1xf32>
    %13 = arith.addf %11, %12 : vector<8x1xf32>
    %14 = math.rsqrt %13 : vector<8x1xf32>
    %c0_5 = arith.constant 0 : index
    %c0_6 = arith.constant 0 : index
    %15 = vector.load %arg2[%c0_5, %c0_6] : memref<8x3xf32, #tpu.memory_space<vmem>>, vector<8x3xf32>
    %16 = vector.extract_strided_slice %15 {offsets = [0, 0], sizes = [8, 1], strides = [1, 1]} : vector<8x3xf32> to vector<8x1xf32>
    %17 = vector.extract_strided_slice %15 {offsets = [0, 1], sizes = [8, 1], strides = [1, 1]} : vector<8x3xf32> to vector<8x1xf32>
    %18 = vector.extract_strided_slice %15 {offsets = [0, 2], sizes = [8, 1], strides = [1, 1]} : vector<8x3xf32> to vector<8x1xf32>
    %cst_7 = arith.constant 1.000000e+00 : f32
    %19 = vector.broadcast %cst_7 : f32 to vector<8x1xf32>
    %20 = arith.subf %19, %16 : vector<8x1xf32>
    %21 = arith.mulf %18, %14 : vector<8x1xf32>
    %22 = arith.addf %21, %20 : vector<8x1xf32>
    %23 = arith.mulf %4, %20 : vector<8x1xf32>
    %24 = arith.addf %17, %23 : vector<8x1xf32>
    %25 = vector.broadcast %22 : vector<8x1xf32> to vector<8x256xf32>
    %26 = arith.mulf %6, %25 : vector<8x256xf32>
    %27 = vector.broadcast %24 : vector<8x1xf32> to vector<8x256xf32>
    %28 = arith.addf %26, %27 : vector<8x256xf32>
    %c0_8 = arith.constant 0 : index
    %c0_9 = arith.constant 0 : index
    %29 = vector.load %arg3[%c0_8, %c0_9] : memref<8x256xf32, #tpu.memory_space<vmem>>, vector<8x256xf32>
    tpu.vector_store %arg3[%c0_8, %c0_9], %28 {strides = array<i32>} : memref<8x256xf32, #tpu.memory_space<vmem>>, vector<8x256xf32>,
    return
  }
  func.func @transform_0(%arg0: i32) -> (i32, i32) {
    %c0_i32 = arith.constant 0 : i32
    %c0_i32_0 = arith.constant 0 : i32
    return %arg0, %c0_i32 : i32, i32
  }
  func.func @transform_1(%arg0: i32) -> (i32, i32) {
    %c0_i32 = arith.constant 0 : i32
    %c0_i32_0 = arith.constant 0 : i32
    return %arg0, %c0_i32 : i32, i32
  }
  func.func @transform_2(%arg0: i32) -> (i32, i32) {
    %c0_i32 = arith.constant 0 : i32
    %c0_i32_0 = arith.constant 0 : i32
    return %arg0, %c0_i32 : i32, i32
  }
}

</mosaic_0001>

<llo_original>
// kernel: tpu_custom_call.1
$region0: #{tpu_custom_call.1}
  #allocation0 [shape = 'u32[]', space=smem, size = 0x4, offset = 0x4, fixed_abs, tag = 'smem constant byte address 0x4 - core index']
  #allocation1 [shape = 'u32[72,128]{1,0:T(1,128)}', space=vmem, size = 0x9000, scoped, tag = 'internal scratch']
  %s0 = inlined_call_operand.hbm [shape: f32[8,256], index: 0, kind: input, shape index: {}]
  %s1 = inlined_call_operand.vmem [shape: f32[8,3], index: 1, kind: input, shape index: {}]
  %s2 = inlined_call_operand.hbm [shape: f32[8,256], index: 2, kind: output, shape index: {}]
  %s3 = sld [smem:[#allocation0]]
  $region22: #{tpu_custom_call.1} parent=0
    _
  %s5 = ssub.s32 1, %s3
  %s6 = scalar_select 0, %s5, %s3
  $region1: #{tpu_custom_call.1} parent=0
    #allocation2 [shape = 'u8[8192]{0}', space=vmem, size = 0x2000, scoped, tag = 'input window, operand 0, single buffered']
    #allocation3 [shape = 's32[1]{0}', space=sflag, size = 0x4, scoped, tag = 'scoped memory for tpu_custom_call.1']
    #allocation4 [shape = 's32[1]{0}', space=sflag, size = 0x4, scoped, tag = 'scoped memory for tpu_custom_call.1']
    #allocation5 [shape = 'u8[8192]{0}', space=vmem, size = 0x2000, scoped, tag = 'output window, operand 0, single buffered']
    %7 = vsyncpa [#allocation3], 0
    %8 = vsyncpa [#allocation4], 0
    // Predicated region
    $region2: #{tpu_custom_call.1} parent=1 // pred_check
      _
    $region3: #{tpu_custom_call.1} parent=1 // pred_check_branch
      %10 = sbr.rel (0) target = $region5
    $region4: #{tpu_custom_call.1} parent=1 // pred_region
      %12 = vsyncadd [#allocation3], 0
      %s14 = sshll.u32 %s0, 4
      %s15 = int_to_ptr.hbm [resolvable:$true] %s14
      %s16 = sshll.u32 [#allocation2], 4
      %s17 = int_to_ptr.vmem [resolvable:$true] %s16
      %19 = dma.hbm_to_vmem [thread:$0]  %s15, 256, %s17, [#allocation3]
    $region5: #{tpu_custom_call.1} parent=1 // pred_fallthru
      _
    // Predicated region
    $region6: #{tpu_custom_call.1} parent=1 // pred_check
      _
    $region7: #{tpu_custom_call.1} parent=1 // pred_check_branch
      %21 = sbr.rel (0) target = $region9
    $region8: #{tpu_custom_call.1} parent=1 // pred_region
      _
    $region9: #{tpu_custom_call.1} parent=1 // pred_fallthru
      _
    // Predicated region
    $region10: #{tpu_custom_call.1} parent=1 // pred_check
      _
    $region11: #{tpu_custom_call.1} parent=1 // pred_check_branch
      %23 = sbr.rel (0) target = $region13
    $region12: #{tpu_custom_call.1} parent=1 // pred_region
      %25 = dma.done [#allocation3], 256
    $region13: #{tpu_custom_call.1} parent=1 // pred_fallthru
      _
    %v26 = vld [vmem:[#allocation2] sm:$0xff]
    %v27 = vld [vmem:[#allocation2 + $0x8] sm:$0xff]
    %v28 = vadd.f32 %v26, %v27
    %29 = vadd.xlane.f32.xlu0 %v28
    %v30 = vpop.xlane.xlu0 %29
    %v31 = vmul.f32 %v30, 0.00390625
    %v32 = vsub.f32 %v26, %v31
    %v33 = vsub.f32 %v27, %v31
    %v34 = vmul.f32 %v32, %v32
    %v35 = vmul.f32 %v33, %v33
    %v36 = vadd.f32 %v34, %v35
    %37 = vadd.xlane.f32.xlu0 %v36
    %v38 = vpop.xlane.xlu0 %37
    %v39 = vmul.f32 %v38, 0.003921569
    %v40 = vadd.f32 %v39, 1e-06
    %v41 = vrsqrt.pop %v40
    %v42 = vmul.f32 %v41, %v40
    %v43 = vmul.f32 %v42, %v41
    %v44 = vmul.f32 0.5, %v43
    %v45 = vsub.f32 1.5, %v44
    %v46 = vmul.f32 %v41, %v45
    %vm47 = vweird.f32 %v40
    %vm48 = vweird.f32 %v41
    %vm49 = vmor %vm47, %vm48
    %v50 = vsel %vm49, %v41, %v46
    %v51 = vld [vmem:[%s1] sm:$0xff]
    %v52 = vsub.f32 1.0, %v51
    %v53 = vmul.f32 %v51, %v50
    %55 = vrot.lane.b32.xlu0 %v52, 2
    %v56 = vpop.permute.xlu0 %55
    %v58 = vadd.f32 %v53, %v56
    %v59 = vmul.f32 %v31, %v52
    %61 = vrot.lane.b32.xlu0 %v59, 1
    %v62 = vpop.permute.xlu0 %61
    %v64 = vadd.f32 %v51, %v62
    %66 = vset.pattern.permute.xlu0 2
    %67 = vperm.xlu0 %66, %v58
    %v68 = vpop.permute.xlu0 %67
    %v70 = vmul.f32 %v32, %v68
    %v71 = vmul.f32 %v33, %v68
    %73 = vset.pattern.permute.xlu0 1
    %74 = vperm.xlu0 %73, %v64
    %v75 = vpop.permute.xlu0 %74
    %v77 = vadd.f32 %v70, %v75
    %v78 = vadd.f32 %v71, %v75
    %79 = vst [vmem:[#allocation5] sm:$0xff] %v77
    %80 = vst [vmem:[#allocation5 + $0x8] sm:$0xff] %v78
    // Predicated region
    $region14: #{tpu_custom_call.1} parent=1 // pred_check
      _
    $region15: #{tpu_custom_call.1} parent=1 // pred_check_branch
      %82 = sbr.rel (0) target = $region17
    $region16: #{tpu_custom_call.1} parent=1 // pred_region
      %84 = vsyncadd [#allocation4], 0
      %s86 = sshll.u32 [#allocation5], 4
      %s87 = int_to_ptr.vmem [resolvable:$true] %s86
      %s88 = sshll.u32 %s2, 4
      %s89 = int_to_ptr.hbm [resolvable:$true] %s88
      %91 = dma.vmem_to_hbm [thread:$0]  %s87, 256, %s89, [#allocation4]
    $region17: #{tpu_custom_call.1} parent=1 // pred_fallthru
      _
    // Predicated region
    $region18: #{tpu_custom_call.1} parent=1 // pred_check
      _
    $region19: #{tpu_custom_call.1} parent=1 // pred_check_branch
      %93 = sbr.rel (0) target = $region21
    $region20: #{tpu_custom_call.1} parent=1 // pred_region
      %95 = dma.done [#allocation4], 256
    $region21: #{tpu_custom_call.1} parent=1 // pred_fallthru
      _
    %96 = vsyncpa [#allocation3], 1
    %97 = vsyncpa [#allocation4], 1

</llo_original>
